<compile_context>
chip_gen: v6e
topology: v6e:2x2x1
jax: 0.10.0
libtpu: 0.0.40
codegen_flags: <defaults>
</compile_context>

<pallas_src>
import functools

import jax
import jax.numpy as jnp
import numpy as np
from jax.experimental import pallas as pl
from jax.experimental.pallas import tpu as pltpu


# ----------------------------------------------------------------------------
# Tiling plan
# ----------------------------------------------------------------------------
def _plan_tiling(B, C, D, itemsizes, force_tile_b=None):
    """Pick (tile_b, n_split, tiles_per_split, b_pad, needs_mask, single_step,
    vmem_limit_bytes) from the problem size and the chip's VMEM capacity."""
    try:
        vmem_cap = int(pltpu.get_tpu_info().vmem_capacity_bytes)
    except Exception:
        vmem_cap = 64 * 1024 * 1024            # conservative (v7x per-core VMEM)

    ow_b, os_b, tgt_b, fw_b, fs_b = itemsizes
    # per-sample bytes of kernel inputs (3 class-sized, 2 feature-sized, tlogt)
    row_in = C * (ow_b + os_b + tgt_b) + D * (fw_b + fs_b) + 4
    # rough per-sample f32 working set of in-kernel temporaries
    row_work = (8 * C + 3 * D + 8) * 4
    # keep double-buffered inputs + working set within ~40% of physical VMEM,
    # capped (diminishing returns past ~16-32 MiB per step)
    budget = min(int(vmem_cap * 0.4), 48 * 1024 * 1024)
    tb_cap = max(8, budget // (2 * row_in + row_work))

    if force_tile_b is None and B <= tb_cap:
        # single-shot fast path: whole batch, no padding, no mask
        tile_b, n_split, tiles_per_split = B, 1, 1
        b_pad, needs_mask, single_step = B, False, True
    else:
        if force_tile_b is not None:
            tile_b = max(8, (int(force_tile_b) // 8) * 8)
        else:
            tile_b = max(8, min(8192, (tb_cap // 8) * 8))
        if tile_b >= B:
            tile_b, n_split, tiles_per_split = B, 1, 1
            b_pad, needs_mask, single_step = B, False, True
        else:
            num_tiles = pl.cdiv(B, tile_b)
            n_split = 2 if num_tiles >= 2 else 1       # v7x: one split per TC
            tiles_per_split = pl.cdiv(num_tiles, n_split)
            b_pad = n_split * tiles_per_split * tile_b
            needs_mask = (b_pad != B)
            single_step = False

    needed = (2 * tile_b * row_in + tile_b * row_work
              + 64 * D + tile_b * 4 + (4 << 20))
    vmem_limit = int(min(max(needed, 32 * 1024 * 1024), int(vmem_cap * 0.9)))
    return tile_b, n_split, tiles_per_split, b_pad, needs_mask, single_step, vmem_limit


# ----------------------------------------------------------------------------
# Kernel
# ----------------------------------------------------------------------------
def _corr_loss_kernel(ow_ref, os_ref, tgt_ref, tlogt_ref, fw_ref, fs_ref,
                      loss_ref, fm_ref, loss_acc_ref,
                      *, batch, tile_b, tiles_per_split, needs_mask,
                      single_step):
    split = pl.program_id(0)           # "parallel": sharded across TCs on v7x
    step = pl.program_id(1)            # "arbitrary": batch-tile reduction

    ow = ow_ref[...].astype(jnp.float32)          # [TB, C]
    os_ = os_ref[...].astype(jnp.float32)         # [TB, C]
    tgt = tgt_ref[...].astype(jnp.float32)        # [TB, C]

    # numerically stable softmax / log-softmax over classes (lane axis);
    # per-row approx reciprocal (EUP) + one reused log(sum) per branch.
    mw = jnp.max(ow, axis=-1, keepdims=True)
    ew = jnp.exp(ow - mw)
    sw = jnp.sum(ew, axis=-1, keepdims=True)
    pred_w = ew * pl.reciprocal(sw, approx=True)
    logz_w = mw + jnp.log(sw)                     # [TB, 1]

    ms = jnp.max(os_, axis=-1, keepdims=True)
    es = jnp.exp(os_ - ms)
    ss = jnp.sum(es, axis=-1, keepdims=True)
    pred_s = es * pl.reciprocal(ss, approx=True)
    logz_s = ms + jnp.log(ss)                     # [TB, 1]

    # sup loss, logs merged.  NOTE: exact `tgt == 0` compare matches the
    # PyTorch semantics (valid while confidence holds exact zeros).
    neg = (tgt == 0.0).astype(jnp.float32)
    sup = neg * (-jnp.log((jnp.abs(1.0 - pred_w) + 1e-9)
                          * (jnp.abs(1.0 - pred_s) + 1e-9)))

    # merged per-sample partial of sup + both KL terms:
    #   sum_c [sup - t * (logp_w + logp_s)] + 2 * sum_c xlogy(t, t)
    # (xlogy row-sum precomputed in the wrapper).  One lane reduce per step.
    cross = tgt * ((ow + os_) - (logz_w + logz_s))
    per_sample = (jnp.sum(sup - cross, axis=-1, keepdims=True)
                  + 2.0 * tlogt_ref[...].astype(jnp.float32))     # [TB, 1]

    if needs_mask:
        # mask padded batch rows (only the sup term is nonzero there)
        row0 = (split * tiles_per_split + step) * tile_b
        rows = row0 + jax.lax.broadcasted_iota(jnp.int32, (tile_b, 1), 0)
        per_sample = jnp.where(rows < batch, per_sample, 0.0)

    # feature batch-sum for the EMA mean (padded feature rows are zero, so no
    # mask is needed); a sublane (axis 0) fold into a lane-dense [1, D] target.
    # The 0.5/B scaling and the EMA combine happen outside the kernel.
    f_half = fw_ref[...].astype(jnp.float32) + fs_ref[...].astype(jnp.float32)
    fsum = jnp.sum(f_half, axis=0, keepdims=True)                 # [1, D]
    fsum3 = fsum.reshape(1, 1, fsum.shape[-1])                    # [1, 1, D]

    if single_step:
        # fast path: no accumulators, no init/finalize branching
        loss_ref[...] = jnp.sum(per_sample).reshape(1, 1, 1)
        fm_ref[...] = fsum3
    else:
        @pl.when(step == 0)
        def _init():
            loss_acc_ref[...] = jnp.zeros_like(loss_acc_ref)
            fm_ref[...] = jnp.zeros_like(fm_ref)

        loss_acc_ref[...] += per_sample          # per-sample partials in VMEM
        fm_ref[...] += fsum3                     # resident lane-dense [1,1,D]

        @pl.when(step == pl.num_programs(1) - 1)
        def _finalize():
            # single cross-row reduce + scalar store, once per split
            loss_ref[...] = jnp.sum(loss_acc_ref[...]).reshape(1, 1, 1)


# ----------------------------------------------------------------------------
# pallas_call wrapper
# ----------------------------------------------------------------------------
def _corr_loss_pallas(ow, os_, tgt, tlogt, fw, fs, *, force_tile_b=None):
    """Returns (un-normalised loss sum, un-scaled feature sum over the batch)."""
    B, C = ow.shape
    D = fw.shape[1]
    itemsizes = tuple(jnp.dtype(a.dtype).itemsize for a in (ow, os_, tgt, fw, fs))
    (tile_b, n_split, tiles_per_split, b_pad, needs_mask, single_step,
     vmem_limit) = _plan_tiling(B, C, D, itemsizes, force_tile_b)

    pad = b_pad - B
    if pad:
        # only the ragged tiled case pays this copy; the fast path and
        # tile-aligned batches stream the original arrays untouched.
        padfn = lambda x: jnp.pad(x, ((0, pad), (0, 0)))
        ow, os_, tgt, tlogt, fw, fs = (padfn(x) for x in (ow, os_, tgt, tlogt, fw, fs))

    kernel = functools.partial(
        _corr_loss_kernel, batch=int(B), tile_b=int(tile_b),
        tiles_per_split=int(tiles_per_split), needs_mask=bool(needs_mask),
        single_step=bool(single_step))

    bmap = lambda c, t: (c * tiles_per_split + t, 0)    # batch-tiled inputs
    pmap_ = lambda c, t: (c, 0, 0)                      # per-split partials

    loss_parts, fm_parts = pl.pallas_call(
        kernel,
        grid=(n_split, tiles_per_split),
        in_specs=[
            pl.BlockSpec((tile_b, C), bmap),   # output_w  [B, C]
            pl.BlockSpec((tile_b, C), bmap),   # output_s  [B, C]
            pl.BlockSpec((tile_b, C), bmap),   # target    [B, C]
            pl.BlockSpec((tile_b, 1), bmap),   # xlogy(t,t) row sums [B, 1]
            pl.BlockSpec((tile_b, D), bmap),   # feat_w    [B, D]
            pl.BlockSpec((tile_b, D), bmap),   # feat_s    [B, D]
        ],
        out_specs=[
            pl.BlockSpec((1, 1, 1), pmap_),    # per-split loss sum
            pl.BlockSpec((1, 1, D), pmap_),    # per-split feature sum
        ],
        out_shape=[
            jax.ShapeDtypeStruct((n_split, 1, 1), jnp.float32),
            jax.ShapeDtypeStruct((n_split, 1, D), jnp.float32),
        ],
        scratch_shapes=[
            pltpu.VMEM((tile_b if not single_step else 8, 1), jnp.float32),
        ],
        compiler_params=pltpu.CompilerParams(
            dimension_semantics=("parallel", "arbitrary"),
            vmem_limit_bytes=int(vmem_limit)),
    )(ow, os_, tgt, tlogt, fw, fs)

    return jnp.sum(loss_parts), jnp.sum(fm_parts, axis=(0, 1))


# ----------------------------------------------------------------------------
# Module wrapper
# ----------------------------------------------------------------------------
class CorrLossRecords:
    """JAX/Pallas port of CORR_loss_RECORDS (forward path, update_target=False)."""

    def __init__(self, confidence, s=30, m=0.9, force_tile_b=None):
        self.confidence = jnp.asarray(confidence)
        self.init_confidence = self.confidence
        self.feat_mean = None                  # stored as [D] once initialised
        self.m = float(m)
        self._force_tile_b = force_tile_b      # tuning/debug knob only
        # Hoisted from the kernel: sum_c xlogy(conf, conf) per dataset row.
        # (Valid while `confidence` is not mutated; the update_target branch
        #  that mutates it is not translated.)
        conf = self.confidence.astype(jnp.float32)
        safe = jnp.where(conf > 0, conf, 1.0)
        self._xlogy_rowsum = jnp.sum(conf * jnp.log(safe), axis=1)     # [N]

    def __call__(self, output_w, output_s, feat_w, feat_s, index,
                 model_cls=None, update_target=False):
        B = output_w.shape[0]

        # glue: row gathers (plain JAX)
        target = self.confidence[index, :]                             # [B, C]
        tlogt = self._xlogy_rowsum[index].astype(jnp.float32).reshape(B, 1)

        loss_sum, feat_sum = _corr_loss_pallas(
            output_w, output_s, target, tlogt, feat_w, feat_s,
            force_tile_b=self._force_tile_b)

        loss = loss_sum / B
        batch_mean = feat_sum * (0.5 / B)      # mean((feat_w + feat_s)/2, axis=0)
        if self.feat_mean is None:
            self.feat_mean = (1.0 - self.m) * batch_mean
        else:
            self.feat_mean = self.m * self.feat_mean + (1.0 - self.m) * batch_mean

        # TODO(synk): update_target branch needs the external `model_cls` head
        # and in-place mutation of self.confidence; not translated.
        return loss


# ----------------------------------------------------------------------------
# Pure-JAX reference + tests
# ----------------------------------------------------------------------------
def _reference_step(confidence, index, ow, os_, fw, fs, m, fm_prev):
    """Pure-JAX reference of the PyTorch forward (fm_prev: [D] or None)."""
    target = confidence[index, :]
    pred_w = jax.nn.softmax(ow, axis=1)
    pred_s = jax.nn.softmax(os_, axis=1)
    neg = (target == 0).astype(jnp.float32)
    sup = neg * (-jnp.log(jnp.abs(1.0 - pred_w) + 1e-9)
                 - jnp.log(jnp.abs(1.0 - pred_s) + 1e-9))
    sup1 = jnp.sum(sup) / ow.shape[0]
    logp_w = jax.nn.log_softmax(ow, axis=1)
    logp_s = jax.nn.log_softmax(os_, axis=1)
    tlogt = jnp.where(target > 0,
                      target * jnp.log(jnp.where(target > 0, target, 1.0)), 0.0)
    kl = (jnp.sum(tlogt - target * logp_w)
          + jnp.sum(tlogt - target * logp_s)) / ow.shape[0]
    bmean = jnp.mean((fw + fs) * 0.5, axis=0)
    fm_new = (1.0 - m) * bmean if fm_prev is None else m * fm_prev + (1.0 - m) * bmean
    return sup1 + kl, fm_new


def _run_case(B, C, D, N, seed, force_tile_b=None):
    key = jax.random.PRNGKey(seed)
    k1, k2, k3, k4, k5, k6, k7 = jax.random.split(key, 7)

    # deterministic partial-label confidence matrix: rows nonneg, sum to 1,
    # with plenty of exact zeros (needed by the `neg` mask in sup_loss).
    mask = (jax.random.uniform(k1, (N, C)) < 0.3).astype(jnp.float32)
    true_lab = jax.random.randint(k2, (N,), 0, C)
    mask = mask.at[jnp.arange(N), true_lab].set(1.0)
    confidence = mask / jnp.sum(mask, axis=1, keepdims=True)

    index = jax.random.randint(k3, (B,), 0, N)
    output_w = jax.random.normal(k4, (B, C), jnp.float32)
    output_s = jax.random.normal(k5, (B, C), jnp.float32)
    feat_w = jax.random.normal(k6, (B, D), jnp.float32)
    feat_s = jax.random.normal(k7, (B, D), jnp.float32)

    mod = CorrLossRecords(confidence, m=0.9, force_tile_b=force_tile_b)
    loss1 = mod(output_w, output_s, feat_w, feat_s, index)   # feat_mean is None branch
    loss2 = mod(output_w, output_s, feat_w, feat_s, index)   # EMA branch
    jax.block_until_ready((loss1, loss2, mod.feat_mean))

    ref1, fm = _reference_step(confidence, index, output_w, output_s,
                               feat_w, feat_s, 0.9, None)
    ref2, fm = _reference_step(confidence, index, output_w, output_s,
                               feat_w, feat_s, 0.9, fm)
    np.testing.assert_allclose(np.asarray(loss1), np.asarray(ref1),
                               rtol=2e-3, atol=2e-3)
    np.testing.assert_allclose(np.asarray(loss2), np.asarray(ref2),
                               rtol=2e-3, atol=2e-3)
    np.testing.assert_allclose(np.asarray(mod.feat_mean), np.asarray(fm),
                               rtol=1e-4, atol=2e-6)


if __name__ == "__main__":
    # single-shot fast path: whole batch in one grid step, no mask
    _run_case(B=8, C=16, D=32, N=64, seed=0)
    # tiled path, batch split across the 2-way "parallel" axis, no padding
    _run_case(B=768, C=16, D=32, N=128, seed=1, force_tile_b=128)
    # tiled path with a ragged batch (padding + row mask)
    _run_case(B=700, C=16, D=32, N=128, seed=2, force_tile_b=128)
    print("KERNEL_OK")
</pallas_src>

<mosaic_0001>
module attributes {stable_mosaic.version = 11 : i64} {
  func.func @_corr_loss_kernel(%arg0: i32, %arg1: i32, %arg2: memref<8x16xf32, #tpu.memory_space<vmem>>, %arg3: memref<8x16xf32, #tpu.memory_space<vmem>>, %arg4: memref<8x16xf32, #tpu.memory_space<vmem>>, %arg5: memref<8x1xf32, #tpu.memory_space<vmem>>, %arg6: memref<8x32xf32, #tpu.memory_space<vmem>>, %arg7: memref<8x32xf32, #tpu.memory_space<vmem>>, %arg8: memref<1x1x1xf32, #tpu.memory_space<vmem>>, %arg9: memref<1x1x32xf32, #tpu.memory_space<vmem>>, %arg10: memref<8x1xf32, #tpu.memory_space<vmem>>) attributes {dimension_semantics = [#tpu.dimension_semantics<parallel>, #tpu.dimension_semantics<arbitrary>], iteration_bounds = array<i64: 1, 1>, scalar_prefetch = 0 : i64, scratch_operands = 1 : i64, tpu.core_type = #tpu.core_type<tc>, window_params = [{transform_indices = @transform_0, window_bounds = array<i64: 8, 16>}, {transform_indices = @transform_1, window_bounds = array<i64: 8, 16>}, {transform_indices = @transform_2, window_bounds = array<i64: 8, 16>}, {transform_indices = @transform_3, window_bounds = array<i64: 8, 1>}, {transform_indices = @transform_4, window_bounds = array<i64: 8, 32>}, {transform_indices = @transform_5, window_bounds = array<i64: 8, 32>}, {transform_indices = @transform_6, window_bounds = array<i64: 1, 1, 1>}, {transform_indices = @transform_7, window_bounds = array<i64: 1, 1, 32>}]} {
    %c0 = arith.constant 0 : index
    %c0_0 = arith.constant 0 : index
    %0 = vector.load %arg2[%c0, %c0_0] : memref<8x16xf32, #tpu.memory_space<vmem>>, vector<8x16xf32>
    %c0_1 = arith.constant 0 : index
    %c0_2 = arith.constant 0 : index
    %1 = vector.load %arg3[%c0_1, %c0_2] : memref<8x16xf32, #tpu.memory_space<vmem>>, vector<8x16xf32>
    %c0_3 = arith.constant 0 : index
    %c0_4 = arith.constant 0 : index
    %2 = vector.load %arg4[%c0_3, %c0_4] : memref<8x16xf32, #tpu.memory_space<vmem>>, vector<8x16xf32>
    %cst = arith.constant dense<0xFF800000> : vector<8xf32>
    %3 = vector.multi_reduction <maximumf>, %0, %cst [1] : vector<8x16xf32> to vector<8xf32>
    %4 = vector.shape_cast %3 : vector<8xf32> to vector<8x1xf32>
    %5 = vector.broadcast %4 : vector<8x1xf32> to vector<8x16xf32>
    %6 = arith.subf %0, %5 : vector<8x16xf32>
    %7 = math.exp %6 : vector<8x16xf32>
    %cst_5 = arith.constant dense<0.000000e+00> : vector<8xf32>
    %8 = vector.multi_reduction <add>, %7, %cst_5 [1] : vector<8x16xf32> to vector<8xf32>
    %9 = vector.shape_cast %8 : vector<8xf32> to vector<8x1xf32>
    %10 = tpu.reciprocal %9 {approx = true} : vector<8x1xf32> -> vector<8x1xf32>
    %11 = vector.broadcast %10 : vector<8x1xf32> to vector<8x16xf32>
    %12 = arith.mulf %7, %11 : vector<8x16xf32>
    %13 = math.log %9 : vector<8x1xf32>
    %14 = arith.addf %4, %13 : vector<8x1xf32>
    %cst_6 = arith.constant dense<0xFF800000> : vector<8xf32>
    %15 = vector.multi_reduction <maximumf>, %1, %cst_6 [1] : vector<8x16xf32> to vector<8xf32>
    %16 = vector.shape_cast %15 : vector<8xf32> to vector<8x1xf32>
    %17 = vector.broadcast %16 : vector<8x1xf32> to vector<8x16xf32>
    %18 = arith.subf %1, %17 : vector<8x16xf32>
    %19 = math.exp %18 : vector<8x16xf32>
    %cst_7 = arith.constant dense<0.000000e+00> : vector<8xf32>
    %20 = vector.multi_reduction <add>, %19, %cst_7 [1] : vector<8x16xf32> to vector<8xf32>
    %21 = vector.shape_cast %20 : vector<8xf32> to vector<8x1xf32>
    %22 = tpu.reciprocal %21 {approx = true} : vector<8x1xf32> -> vector<8x1xf32>
    %23 = vector.broadcast %22 : vector<8x1xf32> to vector<8x16xf32>
    %24 = arith.mulf %19, %23 : vector<8x16xf32>
    %25 = math.log %21 : vector<8x1xf32>
    %26 = arith.addf %16, %25 : vector<8x1xf32>
    %cst_8 = arith.constant 0.000000e+00 : f32
    %27 = vector.broadcast %cst_8 : f32 to vector<8x16xf32>
    %28 = arith.cmpf oeq, %2, %27 : vector<8x16xf32>
    %29 = arith.extui %28 : vector<8x16xi1> to vector<8x16xi32>
    %30 = arith.sitofp %29 : vector<8x16xi32> to vector<8x16xf32>
    %cst_9 = arith.constant 1.000000e+00 : f32
    %31 = vector.broadcast %cst_9 : f32 to vector<8x16xf32>
    %32 = arith.subf %31, %12 : vector<8x16xf32>
    %33 = math.absf %32 : vector<8x16xf32>
    %cst_10 = arith.constant 9.99999971E-10 : f32
    %34 = vector.broadcast %cst_10 : f32 to vector<8x16xf32>
    %35 = arith.addf %33, %34 : vector<8x16xf32>
    %cst_11 = arith.constant 1.000000e+00 : f32
    %36 = vector.broadcast %cst_11 : f32 to vector<8x16xf32>
    %37 = arith.subf %36, %24 : vector<8x16xf32>
    %38 = math.absf %37 : vector<8x16xf32>
    %cst_12 = arith.constant 9.99999971E-10 : f32
    %39 = vector.broadcast %cst_12 : f32 to vector<8x16xf32>
    %40 = arith.addf %38, %39 : vector<8x16xf32>
    %41 = arith.mulf %35, %40 : vector<8x16xf32>
    %42 = math.log %41 : vector<8x16xf32>
    %cst_13 = arith.constant 0.000000e+00 : f32
    %43 = vector.broadcast %cst_13 : f32 to vector<8x16xf32>
    %44 = arith.subf %43, %42 : vector<8x16xf32>
    %45 = arith.mulf %30, %44 : vector<8x16xf32>
    %46 = arith.addf %0, %1 : vector<8x16xf32>
    %47 = arith.addf %14, %26 : vector<8x1xf32>
    %48 = vector.broadcast %47 : vector<8x1xf32> to vector<8x16xf32>
    %49 = arith.subf %46, %48 : vector<8x16xf32>
    %50 = arith.mulf %2, %49 : vector<8x16xf32>
    %51 = arith.subf %45, %50 : vector<8x16xf32>
    %cst_14 = arith.constant dense<0.000000e+00> : vector<8xf32>
    %52 = vector.multi_reduction <add>, %51, %cst_14 [1] : vector<8x16xf32> to vector<8xf32>
    %53 = vector.shape_cast %52 : vector<8xf32> to vector<8x1xf32>
    %c0_15 = arith.constant 0 : index
    %c0_16 = arith.constant 0 : index
    %54 = vector.load %arg5[%c0_15, %c0_16] : memref<8x1xf32, #tpu.memory_space<vmem>>, vector<8x1xf32>
    %cst_17 = arith.constant 2.000000e+00 : f32
    %55 = vector.broadcast %cst_17 : f32 to vector<8x1xf32>
    %56 = arith.mulf %55, %54 : vector<8x1xf32>
    %57 = arith.addf %53, %56 : vector<8x1xf32>
    %c0_18 = arith.constant 0 : index
    %c0_19 = arith.constant 0 : index
    %58 = vector.load %arg6[%c0_18, %c0_19] : memref<8x32xf32, #tpu.memory_space<vmem>>, vector<8x32xf32>
    %c0_20 = arith.constant 0 : index
    %c0_21 = arith.constant 0 : index
    %59 = vector.load %arg7[%c0_20, %c0_21] : memref<8x32xf32, #tpu.memory_space<vmem>>, vector<8x32xf32>
    %60 = arith.addf %58, %59 : vector<8x32xf32>
    %cst_22 = arith.constant dense<0.000000e+00> : vector<32xf32>
    %61 = vector.multi_reduction <add>, %60, %cst_22 [0] : vector<8x32xf32> to vector<32xf32>
    %62 = vector.shape_cast %61 : vector<32xf32> to vector<1x32xf32>
    %63 = vector.shape_cast %62 : vector<1x32xf32> to vector<1x1x32xf32>
    %64 = vector.shape_cast %57 : vector<8x1xf32> to vector<1x8x1xf32>
    %cst_23 = arith.constant dense<0.000000e+00> : vector<1xf32>
    %65 = vector.multi_reduction <add>, %64, %cst_23 [1, 2] : vector<1x8x1xf32> to vector<1xf32>
    %66 = vector.shape_cast %65 : vector<1xf32> to vector<1x1x1xf32>
    %67 = vector.extract %66[0, 0, 0] : f32 from vector<1x1x1xf32>
    %68 = vector.broadcast %67 : f32 to vector<1x1x1xf32>
    %c0_24 = arith.constant 0 : index
    %c0_25 = arith.constant 0 : index
    %c0_26 = arith.constant 0 : index
    %69 = vector.load %arg8[%c0_24, %c0_25, %c0_26] : memref<1x1x1xf32, #tpu.memory_space<vmem>>, vector<1x1x1xf32>
    tpu.vector_store %arg8[%c0_24, %c0_25, %c0_26], %68 {strides = array<i32>} : memref<1x1x1xf32, #tpu.memory_space<vmem>>, vector<1x1x1xf32>,
    %c0_27 = arith.constant 0 : index
    %c0_28 = arith.constant 0 : index
    %c0_29 = arith.constant 0 : index
    %70 = vector.load %arg9[%c0_27, %c0_28, %c0_29] : memref<1x1x32xf32, #tpu.memory_space<vmem>>, vector<1x1x32xf32>
    tpu.vector_store %arg9[%c0_27, %c0_28, %c0_29], %63 {strides = array<i32>} : memref<1x1x32xf32, #tpu.memory_space<vmem>>, vector<1x1x32xf32>,
    return
  }
  func.func @transform_0(%arg0: i32, %arg1: i32) -> (i32, i32) {
    %c1_i32 = arith.constant 1 : i32
    %0 = arith.muli %arg0, %c1_i32 : i32
    %1 = arith.addi %0, %arg1 : i32
    %c0_i32 = arith.constant 0 : i32
    %c0_i32_0 = arith.constant 0 : i32
    return %1, %c0_i32 : i32, i32
  }
  func.func @transform_1(%arg0: i32, %arg1: i32) -> (i32, i32) {
    %c1_i32 = arith.constant 1 : i32
    %0 = arith.muli %arg0, %c1_i32 : i32
    %1 = arith.addi %0, %arg1 : i32
    %c0_i32 = arith.constant 0 : i32
    %c0_i32_0 = arith.constant 0 : i32
    return %1, %c0_i32 : i32, i32
  }
  func.func @transform_2(%arg0: i32, %arg1: i32) -> (i32, i32) {
    %c1_i32 = arith.constant 1 : i32
    %0 = arith.muli %arg0, %c1_i32 : i32
    %1 = arith.addi %0, %arg1 : i32
    %c0_i32 = arith.constant 0 : i32
    %c0_i32_0 = arith.constant 0 : i32
    return %1, %c0_i32 : i32, i32
  }
  func.func @transform_3(%arg0: i32, %arg1: i32) -> (i32, i32) {
    %c1_i32 = arith.constant 1 : i32
    %0 = arith.muli %arg0, %c1_i32 : i32
    %1 = arith.addi %0, %arg1 : i32
    %c0_i32 = arith.constant 0 : i32
    %c0_i32_0 = arith.constant 0 : i32
    return %1, %c0_i32 : i32, i32
  }
  func.func @transform_4(%arg0: i32, %arg1: i32) -> (i32, i32) {
    %c1_i32 = arith.constant 1 : i32
    %0 = arith.muli %arg0, %c1_i32 : i32
    %1 = arith.addi %0, %arg1 : i32
    %c0_i32 = arith.constant 0 : i32
    %c0_i32_0 = arith.constant 0 : i32
    return %1, %c0_i32 : i32, i32
  }
  func.func @transform_5(%arg0: i32, %arg1: i32) -> (i32, i32) {
    %c1_i32 = arith.constant 1 : i32
    %0 = arith.muli %arg0, %c1_i32 : i32
    %1 = arith.addi %0, %arg1 : i32
    %c0_i32 = arith.constant 0 : i32
    %c0_i32_0 = arith.constant 0 : i32
    return %1, %c0_i32 : i32, i32
  }
  func.func @transform_6(%arg0: i32, %arg1: i32) -> (i32, i32, i32) {
    %c0_i32 = arith.constant 0 : i32
    %c0_i32_0 = arith.constant 0 : i32
    %c0_i32_1 = arith.constant 0 : i32
    return %arg0, %c0_i32, %c0_i32_0 : i32, i32, i32
  }
  func.func @transform_7(%arg0: i32, %arg1: i32) -> (i32, i32, i32) {
    %c0_i32 = arith.constant 0 : i32
    %c0_i32_0 = arith.constant 0 : i32
    %c0_i32_1 = arith.constant 0 : i32
    return %arg0, %c0_i32, %c0_i32_0 : i32, i32, i32
  }
}

</mosaic_0001>

<llo_original>
// kernel: tpu_custom_call.1
$region0: #{tpu_custom_call.1}
  #allocation0 [shape = 'u32[]', space=smem, size = 0x4, offset = 0x4, fixed_abs, tag = 'smem constant byte address 0x4 - core index']
  #allocation1 [shape = 'u32[144,128]{1,0:T(1,128)}', space=vmem, size = 0x12000, scoped, tag = 'internal scratch']
  #allocation2 [shape = 'f32[8,1]{1,0:T(8,128)}', space=vmem, size = 0x1000, scoped, tag = 'scratch operand']
  %s0 = inlined_call_operand.vmem [shape: f32[8,16], index: 0, kind: input, shape index: {}]
  %s1 = inlined_call_operand.hbm [shape: f32[8,16], index: 1, kind: input, shape index: {}]
  %s2 = inlined_call_operand.hbm [shape: f32[8,16], index: 2, kind: input, shape index: {}]
  %s3 = inlined_call_operand.vmem [shape: f32[8,1], index: 3, kind: input, shape index: {}]
  %s4 = inlined_call_operand.vmem [shape: f32[8,32], index: 4, kind: input, shape index: {}]
  %s5 = inlined_call_operand.hbm [shape: f32[8,32], index: 5, kind: input, shape index: {}]
  %s6 = inlined_call_operand.hbm [shape: f32[1,1,1], index: 6, kind: output, shape index: {0}]
  %s7 = inlined_call_operand.hbm [shape: f32[1,1,32], index: 7, kind: output, shape index: {1}]
  %8 = xla_tuple %s6, %s7
  %s9 = sld [smem:[#allocation0]]
  $region54: #{tpu_custom_call.1} parent=0
    _
  %s11 = ssub.s32 1, %s9
  %s12 = scalar_select 0, %s11, %s9
  $region1: #{tpu_custom_call.1} parent=0
    #allocation3 [shape = 'u8[4096]{0}', space=vmem, size = 0x1000, scoped, tag = 'input window, operand 1, single buffered']
    #allocation4 [shape = 's32[1]{0}', space=sflag, size = 0x4, scoped, tag = 'scoped memory for tpu_custom_call.1']
    #allocation5 [shape = 's32[1]{0}', space=sflag, size = 0x4, scoped, tag = 'scoped memory for tpu_custom_call.1']
    #allocation6 [shape = 'u8[4096]{0}', space=vmem, size = 0x1000, scoped, tag = 'input window, operand 2, single buffered']
    #allocation7 [shape = 's32[1]{0}', space=sflag, size = 0x4, scoped, tag = 'scoped memory for tpu_custom_call.1']
    #allocation8 [shape = 'u8[4096]{0}', space=vmem, size = 0x1000, scoped, tag = 'input window, operand 5, single buffered']
    #allocation9 [shape = 'u8[512]{0}', space=vmem, size = 0x400, scoped, tag = 'output window, operand 0, single buffered']
    #allocation10 [shape = 'u8[512]{0}', space=vmem, size = 0x400, scoped, tag = 'output window, operand 1, single buffered']
    #allocation11 [shape = 's32[1]{0}', space=sflag, size = 0x4, scoped, tag = 'scoped memory for tpu_custom_call.1']
    %13 = vsyncpa [#allocation4], 0
    %14 = vsyncpa [#allocation7], 0
    %15 = vsyncpa [#allocation5], 0
    %16 = vsyncpa [#allocation11], 0
    // Predicated region
    $region2: #{tpu_custom_call.1} parent=1 // pred_check
      _
    $region3: #{tpu_custom_call.1} parent=1 // pred_check_branch
      %18 = sbr.rel (0) target = $region5
    $region4: #{tpu_custom_call.1} parent=1 // pred_region
      %s19 = sadd.s32 0, 0
      %p20 = scmp.lt.s32.totalorder %s19, 0
      %s21 = scalar_select %p20, %s19, 0
      %s22 = smul.addr %s21, 8
      %s23 = scalar_lea.vmem %s0, %s22
      %s24 = sadd.s32 0, 0
    $region5: #{tpu_custom_call.1} parent=1 // pred_fallthru
      _
    // Predicated region
    $region6: #{tpu_custom_call.1} parent=1 // pred_check
      _
    $region7: #{tpu_custom_call.1} parent=1 // pred_check_branch
      %26 = sbr.rel (0) target = $region9
    $region8: #{tpu_custom_call.1} parent=1 // pred_region
      %s27 = sadd.s32 0, 0
      %s29 = ssub.s32 128, 128
      %30 = vsyncadd [#allocation4], %s29
      %s31 = smul.addr %s27, 128
      %s32 = scalar_lea.hbm %s1, %s31
      %s34 = sshll.u32 [#allocation3], 4
      %s35 = int_to_ptr.vmem [resolvable:$true] %s34
      %37 = dma.hbm_to_vmem [thread:$0]  %s32, 128, %s35, [#allocation4]
    $region9: #{tpu_custom_call.1} parent=1 // pred_fallthru
      _
    // Predicated region
    $region10: #{tpu_custom_call.1} parent=1 // pred_check
      _
    $region11: #{tpu_custom_call.1} parent=1 // pred_check_branch
      %39 = sbr.rel (0) target = $region13
    $region12: #{tpu_custom_call.1} parent=1 // pred_region
      %s40 = sadd.s32 0, 0
      %s42 = ssub.s32 128, 128
      %43 = vsyncadd [#allocation7], %s42
      %s44 = smul.addr %s40, 128
      %s45 = scalar_lea.hbm %s2, %s44
      %s47 = sshll.u32 [#allocation6], 4
      %s48 = int_to_ptr.vmem [resolvable:$true] %s47
      %50 = dma.hbm_to_vmem [thread:$0]  %s45, 128, %s48, [#allocation7]
    $region13: #{tpu_custom_call.1} parent=1 // pred_fallthru
      _
    // Predicated region
    $region14: #{tpu_custom_call.1} parent=1 // pred_check
      _
    $region15: #{tpu_custom_call.1} parent=1 // pred_check_branch
      %52 = sbr.rel (0) target = $region17
    $region16: #{tpu_custom_call.1} parent=1 // pred_region
      %s53 = sadd.s32 0, 0
      %p54 = scmp.lt.s32.totalorder %s53, 0
      %s55 = scalar_select %p54, %s53, 0
      %s56 = smul.addr %s55, 8
      %s57 = scalar_lea.vmem %s3, %s56
      %s58 = sadd.s32 0, 0
    $region17: #{tpu_custom_call.1} parent=1 // pred_fallthru
      _
    // Predicated region
    $region18: #{tpu_custom_call.1} parent=1 // pred_check
      _
    $region19: #{tpu_custom_call.1} parent=1 // pred_check_branch
      %60 = sbr.rel (0) target = $region21
    $region20: #{tpu_custom_call.1} parent=1 // pred_region
      %s61 = sadd.s32 0, 0
      %p62 = scmp.lt.s32.totalorder %s61, 0
      %s63 = scalar_select %p62, %s61, 0
      %s64 = smul.addr %s63, 8
      %s65 = scalar_lea.vmem %s4, %s64
      %s66 = sadd.s32 0, 0
    $region21: #{tpu_custom_call.1} parent=1 // pred_fallthru
      _
    // Predicated region
    $region22: #{tpu_custom_call.1} parent=1 // pred_check
      _
    $region23: #{tpu_custom_call.1} parent=1 // pred_check_branch
      %68 = sbr.rel (0) target = $region25
    $region24: #{tpu_custom_call.1} parent=1 // pred_region
      %s69 = sadd.s32 0, 0
      %s71 = ssub.s32 128, 128
      %72 = vsyncadd [#allocation7], %s71
      %s73 = smul.addr %s69, 128
      %s74 = scalar_lea.hbm %s5, %s73
      %s76 = sshll.u32 [#allocation8], 4
      %s77 = int_to_ptr.vmem [resolvable:$true] %s76
      %79 = dma.hbm_to_vmem [thread:$0]  %s74, 128, %s77, [#allocation7]
    $region25: #{tpu_custom_call.1} parent=1 // pred_fallthru
      _
    // Predicated region
    $region26: #{tpu_custom_call.1} parent=1 // pred_check
      _
    $region27: #{tpu_custom_call.1} parent=1 // pred_check_branch
      %81 = sbr.rel (0) target = $region29
    $region28: #{tpu_custom_call.1} parent=1 // pred_region
      %82 = dma.done [#allocation4], 128
    $region29: #{tpu_custom_call.1} parent=1 // pred_fallthru
      _
    // Predicated region
    $region30: #{tpu_custom_call.1} parent=1 // pred_check
      _
    $region31: #{tpu_custom_call.1} parent=1 // pred_check_branch
      %84 = sbr.rel (0) target = $region33
    $region32: #{tpu_custom_call.1} parent=1 // pred_region
      %85 = dma.done [#allocation7], 128
    $region33: #{tpu_custom_call.1} parent=1 // pred_fallthru
      _
    // Predicated region
    $region34: #{tpu_custom_call.1} parent=1 // pred_check
      _
    $region35: #{tpu_custom_call.1} parent=1 // pred_check_branch
      %87 = sbr.rel (0) target = $region37
    $region36: #{tpu_custom_call.1} parent=1 // pred_region
      %88 = dma.done [#allocation7], 128
    $region37: #{tpu_custom_call.1} parent=1 // pred_fallthru
      _
    %s89 = sadd.s32 0, 0
    %p90 = scmp.lt.s32.totalorder %s89, 0
    %s91 = scalar_select %p90, %s89, 0
    %s92 = smul.addr %s91, 8
    %s93 = scalar_lea.vmem %s0, %s92
    %s94 = sadd.s32 0, 0
    %p95 = scmp.lt.s32.totalorder %s94, 0
    %s96 = scalar_select %p95, %s94, 0
    %s97 = smul.addr %s96, 8
    %s98 = scalar_lea.vmem %s3, %s97
    %s99 = sadd.s32 0, 0
    %p100 = scmp.lt.s32.totalorder %s99, 0
    %s101 = scalar_select %p100, %s99, 0
    %s102 = smul.addr %s101, 8
    %s103 = scalar_lea.vmem %s4, %s102
    %s104 = sadd.s32 0, 0
    %p105 = scmp.lt.s32.totalorder %s104, 0
    %s106 = scalar_select %p105, %s104, 0
    %s107 = smul.addr %s106, 8
    %s108 = scalar_lea.vmem %s0, %s107
    %s109 = sadd.s32 0, 0
    %s110 = sadd.s32 0, 0
    %s111 = sadd.s32 0, 0
    %s112 = sadd.s32 0, 0
    %p113 = scmp.lt.s32.totalorder %s112, 0
    %s114 = scalar_select %p113, %s112, 0
    %s115 = smul.addr %s114, 8
    %s116 = scalar_lea.vmem %s3, %s115
    %s117 = sadd.s32 0, 0
    %s118 = sadd.s32 0, 0
    %p119 = scmp.lt.s32.totalorder %s118, 0
    %s120 = scalar_select %p119, %s118, 0
    %s121 = smul.addr %s120, 8
    %s122 = scalar_lea.vmem %s4, %s121
    %s123 = sadd.s32 0, 0
    %s124 = sadd.s32 0, 0
    %v125 = vld [vmem:[%s108] sm:$0xff]
    %v126 = vld [vmem:[#allocation3] sm:$0xff]
    %v127 = vld [vmem:[#allocation6] sm:$0xff]
    %vm128 = vcmask 130048
    %v129 = vsel %vm128, %v125, -inf
    %130 = vmax.xlane.f32.xlu0 %v129
    %v131 = vpop.xlane.xlu0 %130
    %v132 = vsub.f32 %v125, %v131
    %v133 = vmul.f32 %v132, 1.442695
    %v134 = vpow.pop %v133
    %v135 = vsel %vm128, %v134, 0.0
    %136 = vadd.xlane.f32.xlu0 %v135
    %v137 = vpop.xlane.xlu0 %136
    %v138 = vrcp.pop %v137
    %v139 = vmul.f32 %v134, %v138
    %v140 = vlog2.pop %v137
    %v141 = vmul.f32 %v140, 0.6931472
    %v142 = vadd.f32 %v131, %v141
    %v143 = vsel %vm128, %v126, -inf
    %144 = vmax.xlane.f32.xlu0 %v143
    %v145 = vpop.xlane.xlu0 %144
    %v146 = vsub.f32 %v126, %v145
    %v147 = vmul.f32 %v146, 1.442695
    %v148 = vpow.pop %v147
    %v149 = vsel %vm128, %v148, 0.0
    %150 = vadd.xlane.f32.xlu0 %v149
    %v151 = vpop.xlane.xlu0 %150
    %v152 = vrcp.pop %v151
    %v153 = vmul.f32 %v148, %v152
    %v154 = vlog2.pop %v151
    %v155 = vmul.f32 %v154, 0.6931472
    %v156 = vadd.f32 %v145, %v155
    %vm157 = vcmp.eq.f32.partialorder %v127, 0.0
    %v158 = vsel %vm157, 1, 0
    %v159 = vcvt.s32.f32 %v158
    %v160 = vsub.f32 1.0, %v139
    %v161 = vand.u32 2147483647, %v160
    %v162 = vadd.f32 %v161, 1e-09
    %v163 = vsub.f32 1.0, %v153
    %v164 = vand.u32 2147483647, %v163
    %v165 = vadd.f32 %v164, 1e-09
    %v166 = vmul.f32 %v162, %v165
    %v167 = vlog2.pop %v166
    %v168 = vmul.f32 %v167, 0.6931472
    %v169 = vsub.f32 0.0, %v168
    %v170 = vmul.f32 %v159, %v169
    %v171 = vadd.f32 %v125, %v126
    %v172 = vadd.f32 %v142, %v156
    %v173 = vsub.f32 %v171, %v172
    %v174 = vmul.f32 %v127, %v173
    %v175 = vsub.f32 %v170, %v174
    %v176 = vsel %vm128, %v175, 0.0
    %177 = vadd.xlane.f32.xlu0 %v176
    %v178 = vpop.xlane.xlu0 %177
    %v179 = vld [vmem:[%s116] sm:$0xff]
    %v180 = vmul.f32 %v179, 2.0
    %v181 = vadd.f32 %v178, %v180
    %v182 = vld [vmem:[%s122] sm:$0xff]
    %v183 = vld [vmem:[#allocation8] sm:$0xff]
    %v184 = vadd.f32 %v182, %v183
    %vm185 = vcmask 261120
    %v186 = vsel %vm185, %v184, 0.0
    %v187 = vrot.slane %v186, 4
    %v188 = vadd.f32 %v186, %v187
    %v189 = vrot.slane %v188, 2
    %v190 = vadd.f32 %v188, %v189
    %v191 = vrot.slane %v190, 1
    %v192 = vadd.f32 %v190, %v191
    %vm193 = vcmask 7168
    %v194 = vsel %vm193, %v181, 0.0
    %195 = vadd.xlane.f32.xlu0 %v194
    %v196 = vpop.xlane.xlu0 %195
    %v197 = vrot.slane %v196, 4
    %v198 = vadd.f32 %v196, %v197
    %v199 = vrot.slane %v198, 2
    %v200 = vadd.f32 %v198, %v199
    %v201 = vrot.slane %v200, 1
    %v202 = vadd.f32 %v200, %v201
    %s203 = vtos %v202
    %v204 = vstv %s203
    %vm205 = vcmask 0
    %206 = vst.msk [vmem:[#allocation9] sm:$0x1] %vm205, %v204
    %vm207 = vcmask 253952
    %208 = vst.msk [vmem:[#allocation10] sm:$0x1] %vm207, %v192
    // Predicated region
    $region38: #{tpu_custom_call.1} parent=1 // pred_check
      _
    $region39: #{tpu_custom_call.1} parent=1 // pred_check_branch
      %210 = sbr.rel (0) target = $region41
    $region40: #{tpu_custom_call.1} parent=1 // pred_region
      %s212 = ssub.s32 16, 16
      %213 = vsyncadd [#allocation5], %s212
      %s215 = sshll.u32 [#allocation9], 4
      %s216 = int_to_ptr.vmem [resolvable:$true] %s215
      %218 = dma.vmem_to_hbm [thread:$0]  %s216, 16, %s6, [#allocation5]
    $region41: #{tpu_custom_call.1} parent=1 // pred_fallthru
      _
    // Predicated region
    $region42: #{tpu_custom_call.1} parent=1 // pred_check
      _
    $region43: #{tpu_custom_call.1} parent=1 // pred_check_branch
      %220 = sbr.rel (0) target = $region45
    $region44: #{tpu_custom_call.1} parent=1 // pred_region
      %s222 = ssub.s32 16, 16
      %223 = vsyncadd [#allocation11], %s222
      %s225 = sshll.u32 [#allocation10], 4
      %s226 = int_to_ptr.vmem [resolvable:$true] %s225
      %228 = dma.vmem_to_hbm [thread:$0]  %s226, 16, %s7, [#allocation11]
    $region45: #{tpu_custom_call.1} parent=1 // pred_fallthru
      _
    // Predicated region
    $region46: #{tpu_custom_call.1} parent=1 // pred_check
      _
    $region47: #{tpu_custom_call.1} parent=1 // pred_check_branch
      %230 = sbr.rel (0) target = $region49
    $region48: #{tpu_custom_call.1} parent=1 // pred_region
      %231 = dma.done [#allocation5], 16
    $region49: #{tpu_custom_call.1} parent=1 // pred_fallthru
      _
    // Predicated region
    $region50: #{tpu_custom_call.1} parent=1 // pred_check
      _
    $region51: #{tpu_custom_call.1} parent=1 // pred_check_branch
      %233 = sbr.rel (0) target = $region53
    $region52: #{tpu_custom_call.1} parent=1 // pred_region
      %234 = dma.done [#allocation11], 16
    $region53: #{tpu_custom_call.1} parent=1 // pred_fallthru
      _
    %235 = vsyncpa [#allocation4], 1
    %236 = vsyncpa [#allocation7], 1
    %237 = vsyncpa [#allocation5], 1
    %238 = vsyncpa [#allocation11], 1

</llo_original>
